<compile_context>
chip_gen: v5e
topology: v5e:2x2
jax: 0.10.0
libtpu: 0.0.40
codegen_flags: <defaults>
</compile_context>

<pallas_src>
import jax
import jax.numpy as jnp
from jax.experimental import pallas as pl
from jax.experimental.pallas import tpu as pltpu


# ---------------------------------------------------------------------------
# Kernel: one batch element per grid step, block = (C, H*W).
# ---------------------------------------------------------------------------
def channel_gate_kernel(x_ref, w1_ref, b1_ref, w2_ref, b2_ref, out_ref):
    # x_ref : (C, HW)   image, channels on sublanes, flattened spatial on lanes
    # w1_ref: (Cr, C)   torch Linear weight (out, in)
    # b1_ref: (Cr, 1)
    # w2_ref: (C, Cr)
    # b2_ref: (C, 1)
    x = x_ref[...]
    _, HW = x_ref.shape
    inv_hw = 1.0 / float(HW)

    # Spatial pools per channel -> (C, 1) columns (lane reductions on the XLU).
    sum_p = jnp.sum(x, axis=1, keepdims=True)
    avg_p = sum_p * inv_hw
    max_p = jnp.max(x, axis=1, keepdims=True)
    lse_p = max_p + jnp.log(jnp.sum(jnp.exp(x - max_p), axis=1, keepdims=True))

    pools = jnp.concatenate([avg_p, max_p, lse_p], axis=1)        # (C, 3)

    # Shared MLP applied to all three pooled vectors in a single pair of
    # matmuls (gate stays a (C, 1) column -> no cross-lane transpose needed).
    h = jnp.dot(w1_ref[...], pools,
                preferred_element_type=jnp.float32) + b1_ref[...]  # (Cr, 3)
    h = jnp.maximum(h, 0.0)
    att = jnp.dot(w2_ref[...], h,
                  preferred_element_type=jnp.float32) + b2_ref[...]  # (C, 3)
    att_sum = jnp.sum(att, axis=1, keepdims=True)                  # (C, 1)

    gate = 1.0 / (1.0 + jnp.exp(-att_sum))                         # sigmoid
    out_ref[...] = x * gate                                        # lane-dense store


# ---------------------------------------------------------------------------
# Wrapper
# ---------------------------------------------------------------------------
def channel_gate_forward(x, W1, b1, W2, b2):
    """x: (B, C, H, W) f32.  W1: (Cr, C), b1: (Cr,), W2: (C, Cr), b2: (C,)
    (PyTorch Linear (out, in) layout)."""
    B, C, H, W = x.shape
    Cr = W1.shape[0]
    HW = H * W
    x2 = x.reshape(B, C, HW).astype(jnp.float32)   # free reshape (contiguous)

    out2 = pl.pallas_call(
        channel_gate_kernel,
        grid=(B,),
        out_shape=jax.ShapeDtypeStruct((B, C, HW), jnp.float32),
        in_specs=[
            pl.BlockSpec((None, C, HW), lambda b: (b, 0, 0)),   # batch dim squeezed
            pl.BlockSpec((Cr, C), lambda b: (0, 0)),
            pl.BlockSpec((Cr, 1), lambda b: (0, 0)),
            pl.BlockSpec((C, Cr), lambda b: (0, 0)),
            pl.BlockSpec((C, 1), lambda b: (0, 0)),
        ],
        out_specs=pl.BlockSpec((None, C, HW), lambda b: (b, 0, 0)),
        compiler_params=pltpu.CompilerParams(
            dimension_semantics=("parallel",),        # shard batch across TCs (v7x)
            vmem_limit_bytes=64 * 1024 * 1024,        # raise v5e's 16 MiB default
        ),
    )(
        x2,
        W1.astype(jnp.float32),
        b1.reshape(Cr, 1).astype(jnp.float32),
        W2.astype(jnp.float32),
        b2.reshape(C, 1).astype(jnp.float32),
    )
    return out2.reshape(B, C, H, W)


# ---------------------------------------------------------------------------
# Pure-JAX reference (for correctness check)
# ---------------------------------------------------------------------------
def channel_gate_ref(x, W1, b1, W2, b2):
    B, C, H, W = x.shape

    def mlp(p):
        h = jnp.maximum(p @ W1.T + b1, 0.0)
        return h @ W2.T + b2

    xf = x.reshape(B, C, -1)
    avg_p = jnp.mean(xf, axis=2)
    max_p = jnp.max(xf, axis=2)
    m = jnp.max(xf, axis=2)
    lse_p = m + jnp.log(jnp.sum(jnp.exp(xf - m[:, :, None]), axis=2))
    att = mlp(avg_p) + mlp(max_p) + mlp(lse_p)
    return x * jax.nn.sigmoid(att)[:, :, None, None]


if __name__ == "__main__":
    B, C, H, W = 2, 32, 16, 16
    reduction_ratio = 16
    Cr = C // reduction_ratio

    key = jax.random.PRNGKey(0)
    kx, k1, k2, k3, k4 = jax.random.split(key, 5)
    x = jax.random.normal(kx, (B, C, H, W), jnp.float32)
    # MLP: Linear(C, C//r) -> ReLU -> Linear(C//r, C), torch weight layout (out, in)
    W1 = jax.random.normal(k1, (Cr, C), jnp.float32) * 0.2
    b1 = jax.random.normal(k2, (Cr,), jnp.float32) * 0.1
    W2 = jax.random.normal(k3, (C, Cr), jnp.float32) * 0.2
    b2 = jax.random.normal(k4, (C,), jnp.float32) * 0.1

    out = channel_gate_forward(x, W1, b1, W2, b2)
    out = jax.block_until_ready(out)

    ref = channel_gate_ref(x, W1, b1, W2, b2)
    assert out.shape == (B, C, H, W)
    max_err = float(jnp.max(jnp.abs(out - ref)))
    if max_err > 1e-3:
        raise AssertionError(f"Pallas ChannelGate mismatch vs reference: max_err={max_err}")
    print("KERNEL_OK")
</pallas_src>

<mosaic_0001>
module attributes {stable_mosaic.version = 11 : i64} {
  func.func @channel_gate_kernel(%arg0: i32, %arg1: memref<1x32x256xf32, #tpu.memory_space<vmem>>, %arg2: memref<2x32xf32, #tpu.memory_space<vmem>>, %arg3: memref<2x1xf32, #tpu.memory_space<vmem>>, %arg4: memref<32x2xf32, #tpu.memory_space<vmem>>, %arg5: memref<32x1xf32, #tpu.memory_space<vmem>>, %arg6: memref<1x32x256xf32, #tpu.memory_space<vmem>>) attributes {dimension_semantics = [#tpu.dimension_semantics<parallel>], iteration_bounds = array<i64: 2>, scalar_prefetch = 0 : i64, scratch_operands = 0 : i64, tpu.core_type = #tpu.core_type<tc>, window_params = [{transform_indices = @transform_0, window_bounds = array<i64: 1, 32, 256>}, {pipeline_mode = #tpu.pipeline_mode<synchronous>, transform_indices = @transform_1, window_bounds = array<i64: 2, 32>}, {pipeline_mode = #tpu.pipeline_mode<synchronous>, transform_indices = @transform_2, window_bounds = array<i64: 2, 1>}, {pipeline_mode = #tpu.pipeline_mode<synchronous>, transform_indices = @transform_3, window_bounds = array<i64: 32, 2>}, {pipeline_mode = #tpu.pipeline_mode<synchronous>, transform_indices = @transform_4, window_bounds = array<i64: 32, 1>}, {transform_indices = @transform_5, window_bounds = array<i64: 1, 32, 256>}]} {
    %c0 = arith.constant 0 : index
    %c0_0 = arith.constant 0 : index
    %c0_1 = arith.constant 0 : index
    %0 = vector.load %arg1[%c0, %c0_0, %c0_1] : memref<1x32x256xf32, #tpu.memory_space<vmem>>, vector<1x32x256xf32>
    %1 = vector.shape_cast %0 : vector<1x32x256xf32> to vector<32x256xf32>
    %cst = arith.constant dense<0.000000e+00> : vector<32xf32>
    %2 = vector.multi_reduction <add>, %1, %cst [1] : vector<32x256xf32> to vector<32xf32>
    %3 = vector.shape_cast %2 : vector<32xf32> to vector<32x1xf32>
    %cst_2 = arith.constant 3.906250e-03 : f32
    %4 = vector.broadcast %cst_2 : f32 to vector<32x1xf32>
    %5 = arith.mulf %3, %4 : vector<32x1xf32>
    %cst_3 = arith.constant dense<0xFF800000> : vector<32xf32>
    %6 = vector.multi_reduction <maximumf>, %1, %cst_3 [1] : vector<32x256xf32> to vector<32xf32>
    %7 = vector.shape_cast %6 : vector<32xf32> to vector<32x1xf32>
    %8 = vector.broadcast %7 : vector<32x1xf32> to vector<32x256xf32>
    %9 = arith.subf %1, %8 : vector<32x256xf32>
    %10 = math.exp %9 : vector<32x256xf32>
    %cst_4 = arith.constant dense<0.000000e+00> : vector<32xf32>
    %11 = vector.multi_reduction <add>, %10, %cst_4 [1] : vector<32x256xf32> to vector<32xf32>
    %12 = vector.shape_cast %11 : vector<32xf32> to vector<32x1xf32>
    %13 = math.log %12 : vector<32x1xf32>
    %14 = arith.addf %7, %13 : vector<32x1xf32>
    %15 = tpu.concatenate %5, %7, %14 in 1 : vector<32x1xf32>, vector<32x1xf32>, vector<32x1xf32> -> vector<32x3xf32>
    %c0_5 = arith.constant 0 : index
    %c0_6 = arith.constant 0 : index
    %16 = vector.load %arg2[%c0_5, %c0_6] : memref<2x32xf32, #tpu.memory_space<vmem>>, vector<2x32xf32>
    %cst_7 = arith.constant dense<0.000000e+00> : vector<2x3xf32>
    %17 = tpu.matmul %16, %15, %cst_7 {dimension_numbers = #tpu.dot_dimension_numbers<[1], [0], [0], [1], [0, 0, 1, 1], [], []>} : vector<2x32xf32>, vector<32x3xf32>, vector<2x3xf32> -> vector<2x3xf32>
    %c0_8 = arith.constant 0 : index
    %c0_9 = arith.constant 0 : index
    %18 = vector.load %arg3[%c0_8, %c0_9] : memref<2x1xf32, #tpu.memory_space<vmem>>, vector<2x1xf32>
    %19 = vector.broadcast %18 : vector<2x1xf32> to vector<2x3xf32>
    %20 = arith.addf %17, %19 : vector<2x3xf32>
    %cst_10 = arith.constant 0.000000e+00 : f32
    %21 = vector.broadcast %cst_10 : f32 to vector<2x3xf32>
    %22 = arith.maximumf %20, %21 : vector<2x3xf32>
    %c0_11 = arith.constant 0 : index
    %c0_12 = arith.constant 0 : index
    %23 = vector.load %arg4[%c0_11, %c0_12] : memref<32x2xf32, #tpu.memory_space<vmem>>, vector<32x2xf32>
    %cst_13 = arith.constant dense<0.000000e+00> : vector<32x3xf32>
    %24 = tpu.matmul %23, %22, %cst_13 {dimension_numbers = #tpu.dot_dimension_numbers<[1], [0], [0], [1], [0, 0, 1, 1], [], []>} : vector<32x2xf32>, vector<2x3xf32>, vector<32x3xf32> -> vector<32x3xf32>
    %c0_14 = arith.constant 0 : index
    %c0_15 = arith.constant 0 : index
    %25 = vector.load %arg5[%c0_14, %c0_15] : memref<32x1xf32, #tpu.memory_space<vmem>>, vector<32x1xf32>
    %26 = vector.broadcast %25 : vector<32x1xf32> to vector<32x3xf32>
    %27 = arith.addf %24, %26 : vector<32x3xf32>
    %cst_16 = arith.constant dense<0.000000e+00> : vector<32xf32>
    %28 = vector.multi_reduction <add>, %27, %cst_16 [1] : vector<32x3xf32> to vector<32xf32>
    %29 = vector.shape_cast %28 : vector<32xf32> to vector<32x1xf32>
    %cst_17 = arith.constant 0.000000e+00 : f32
    %30 = vector.broadcast %cst_17 : f32 to vector<32x1xf32>
    %31 = arith.subf %30, %29 : vector<32x1xf32>
    %32 = math.exp %31 : vector<32x1xf32>
    %cst_18 = arith.constant 1.000000e+00 : f32
    %33 = vector.broadcast %cst_18 : f32 to vector<32x1xf32>
    %34 = arith.addf %33, %32 : vector<32x1xf32>
    %cst_19 = arith.constant 1.000000e+00 : f32
    %35 = vector.broadcast %cst_19 : f32 to vector<32x1xf32>
    %36 = arith.divf %35, %34 : vector<32x1xf32>
    %37 = vector.broadcast %36 : vector<32x1xf32> to vector<32x256xf32>
    %38 = arith.mulf %1, %37 : vector<32x256xf32>
    %c0_20 = arith.constant 0 : index
    %c0_21 = arith.constant 0 : index
    %c0_22 = arith.constant 0 : index
    %39 = vector.load %arg6[%c0_20, %c0_21, %c0_22] : memref<1x32x256xf32, #tpu.memory_space<vmem>>, vector<1x32x256xf32>
    %40 = vector.shape_cast %39 : vector<1x32x256xf32> to vector<32x256xf32>
    %41 = vector.shape_cast %38 : vector<32x256xf32> to vector<1x32x256xf32>
    tpu.vector_store %arg6[%c0_20, %c0_21, %c0_22], %41 {strides = array<i32>} : memref<1x32x256xf32, #tpu.memory_space<vmem>>, vector<1x32x256xf32>,
    return
  }
  func.func @transform_0(%arg0: i32) -> (i32, i32, i32) {
    %c0_i32 = arith.constant 0 : i32
    %c0_i32_0 = arith.constant 0 : i32
    %c0_i32_1 = arith.constant 0 : i32
    return %arg0, %c0_i32, %c0_i32_0 : i32, i32, i32
  }
  func.func @transform_1(%arg0: i32) -> (i32, i32) {
    %c0_i32 = arith.constant 0 : i32
    %c0_i32_0 = arith.constant 0 : i32
    %c0_i32_1 = arith.constant 0 : i32
    return %c0_i32, %c0_i32_0 : i32, i32
  }
  func.func @transform_2(%arg0: i32) -> (i32, i32) {
    %c0_i32 = arith.constant 0 : i32
    %c0_i32_0 = arith.constant 0 : i32
    %c0_i32_1 = arith.constant 0 : i32
    return %c0_i32, %c0_i32_0 : i32, i32
  }
  func.func @transform_3(%arg0: i32) -> (i32, i32) {
    %c0_i32 = arith.constant 0 : i32
    %c0_i32_0 = arith.constant 0 : i32
    %c0_i32_1 = arith.constant 0 : i32
    return %c0_i32, %c0_i32_0 : i32, i32
  }
  func.func @transform_4(%arg0: i32) -> (i32, i32) {
    %c0_i32 = arith.constant 0 : i32
    %c0_i32_0 = arith.constant 0 : i32
    %c0_i32_1 = arith.constant 0 : i32
    return %c0_i32, %c0_i32_0 : i32, i32
  }
  func.func @transform_5(%arg0: i32) -> (i32, i32, i32) {
    %c0_i32 = arith.constant 0 : i32
    %c0_i32_0 = arith.constant 0 : i32
    %c0_i32_1 = arith.constant 0 : i32
    return %arg0, %c0_i32, %c0_i32_0 : i32, i32, i32
  }
}

</mosaic_0001>

<llo_original>
// kernel: tpu_custom_call.1
$region0: #{tpu_custom_call.1}
  #allocation0 [shape = 'u32[]', space=smem, size = 0x4, offset = 0x4, fixed_abs, tag = 'smem constant byte address 0x4 - core index']
  #allocation1 [shape = 'u32[72,128]{1,0:T(1,128)}', space=vmem, size = 0x9000, scoped, tag = 'internal scratch']
  %s0 = inlined_call_operand.hbm [shape: f32[2,32,256], index: 0, kind: input, shape index: {}]
  %s1 = inlined_call_operand.vmem [shape: f32[2,32], index: 1, kind: input, shape index: {}]
  %s2 = inlined_call_operand.vmem [shape: f32[2,1], index: 2, kind: input, shape index: {}]
  %s3 = inlined_call_operand.vmem [shape: f32[32,2], index: 3, kind: input, shape index: {}]
  %s4 = inlined_call_operand.vmem [shape: f32[32,1], index: 4, kind: input, shape index: {}]
  %s5 = inlined_call_operand.hbm [shape: f32[2,32,256], index: 5, kind: output, shape index: {}]
  %s6 = sld [smem:[#allocation0]]
  $region57: #{tpu_custom_call.1} parent=0
    _
  %s8 = ssub.s32 1, %s6
  %s9 = scalar_select 0, %s8, %s6
  $region1: #{tpu_custom_call.1} parent=0
    #allocation2 [shape = 'u8[65536]{0}', space=vmem, size = 0x10000, scoped, tag = 'input window, operand 0']
    #allocation3 [shape = 's32[2]{0}', space=sflag, size = 0x8, scoped, tag = 'scoped memory for tpu_custom_call.1']
    #allocation4 [shape = 's32[2]{0}', space=sflag, size = 0x8, scoped, tag = 'scoped memory for tpu_custom_call.1']
    #allocation5 [shape = 'u8[65536]{0}', space=vmem, size = 0x10000, scoped, tag = 'output window, operand 0']
    %10 = vsyncpa [#allocation3], 0
    %s11 = scalar_lea.sflag [#allocation3], 1
    %12 = vsyncpa %s11, 0
    %13 = vsyncpa [#allocation4], 0
    %s14 = scalar_lea.sflag [#allocation4], 1
    %15 = vsyncpa %s14, 0
    loop: start=0, step=1, limit=4
    $region2: #{tpu_custom_call.1} parent=1 // loop_pre_header
      _
    $region3: #{tpu_custom_call.1} parent=1 // loop_header
      %s17 = sphi 0, %s21
      %p18 = scmp.ge.s32.totalorder %s17, 4
      %s27 = sphi 0, %s29
      %s30 = sphi 0, %s27
      %s31 = sphi 0, %s30
      %s47 = sphi 0, %s31
      %s51 = sphi 0, %s51
      %s53 = sphi 0, %s51
      %s54 = sphi 0, %s53
      %s68 = sphi 0, %s54
      %s72 = sphi 0, %s72
      %s74 = sphi 0, %s72
      %s75 = sphi 0, %s74
      %s89 = sphi 0, %s75
      %s93 = sphi 0, %s93
      %s95 = sphi 0, %s93
      %s96 = sphi 0, %s95
      %s110 = sphi 0, %s96
      %s114 = sphi 0, %s114
      %s116 = sphi 0, %s114
      %s117 = sphi 0, %s116
      %s131 = sphi 0, %s117
      %s137 = sphi 0, %s139
      %s140 = sphi 0, %s137
      %s141 = sphi 0, %s140
      %s157 = sphi 0, %s141
    $region4: #{tpu_custom_call.1} parent=1 // loop_header_branch
      %20 = sbr.rel (%p18) target = $region8
    $region5: #{tpu_custom_call.1} parent=1 // loop_body
      %s22 = ssub.s32 %s17, 1
      %s23 = ssub.s32 %s17, 2
      %s24 = sadd.s32 %s17, 1
      %s25 = ssub.s32 %s17, %s24
      %p26 = scmp.eq.s32.totalorder %s25, 0
      %s28 = sadd.s32 %s27, 1
      %s29 = scalar_select %p26, %s27, %s28
      %p32 = pneg %p26
      %p33 = scmp.eq.s32.totalorder %s17, 1
      %p34 = por %p32, %p33
      %p35 = scmp.ne.s32.totalorder %s27, %s30
      %p36 = scmp.eq.s32.totalorder %s17, 0
      %p37 = por %p35, %p36
      %p38 = scmp.ne.s32.totalorder %s27, %s30
      %p39 = scmp.eq.s32.totalorder %s22, 1
      %p40 = por %p38, %p39
      %p41 = scmp.ne.s32.totalorder %s30, %s31
      %p42 = scmp.eq.s32.totalorder %s22, 0
      %p43 = por %p41, %p42
      %p44 = scmp.ne.s32.totalorder %s30, %s31
      %p45 = scmp.eq.s32.totalorder %s23, 1
      %p46 = por %p44, %p45
      %p48 = scmp.ne.s32.totalorder %s31, %s47
      %p49 = scmp.eq.s32.totalorder %s23, 0
      %p50 = por %p48, %p49
      %s52 = sadd.s32 %s51, 1
      %p55 = scmp.eq.s32.totalorder %s17, 1
      %p56 = scmp.ne.s32.totalorder %s51, %s53
      %p57 = scmp.eq.s32.totalorder %s17, 0
      %p58 = por %p56, %p57
      %p59 = scmp.ne.s32.totalorder %s51, %s53
      %p60 = scmp.eq.s32.totalorder %s22, 1
      %p61 = por %p59, %p60
      %p62 = scmp.ne.s32.totalorder %s53, %s54
      %p63 = scmp.eq.s32.totalorder %s22, 0
      %p64 = por %p62, %p63
      %p65 = scmp.ne.s32.totalorder %s53, %s54
      %p66 = scmp.eq.s32.totalorder %s23, 1
      %p67 = por %p65, %p66
      %p69 = scmp.ne.s32.totalorder %s54, %s68
      %p70 = scmp.eq.s32.totalorder %s23, 0
      %p71 = por %p69, %p70
      %s73 = sadd.s32 %s72, 1
      %p76 = scmp.eq.s32.totalorder %s17, 1
      %p77 = scmp.ne.s32.totalorder %s72, %s74
      %p78 = scmp.eq.s32.totalorder %s17, 0
      %p79 = por %p77, %p78
      %p80 = scmp.ne.s32.totalorder %s72, %s74
      %p81 = scmp.eq.s32.totalorder %s22, 1
      %p82 = por %p80, %p81
      %p83 = scmp.ne.s32.totalorder %s74, %s75
      %p84 = scmp.eq.s32.totalorder %s22, 0
      %p85 = por %p83, %p84
      %p86 = scmp.ne.s32.totalorder %s74, %s75
      %p87 = scmp.eq.s32.totalorder %s23, 1
      %p88 = por %p86, %p87
      %p90 = scmp.ne.s32.totalorder %s75, %s89
      %p91 = scmp.eq.s32.totalorder %s23, 0
      %p92 = por %p90, %p91
      %s94 = sadd.s32 %s93, 1
      %p97 = scmp.eq.s32.totalorder %s17, 1
      %p98 = scmp.ne.s32.totalorder %s93, %s95
      %p99 = scmp.eq.s32.totalorder %s17, 0
      %p100 = por %p98, %p99
      %p101 = scmp.ne.s32.totalorder %s93, %s95
      %p102 = scmp.eq.s32.totalorder %s22, 1
      %p103 = por %p101, %p102
      %p104 = scmp.ne.s32.totalorder %s95, %s96
      %p105 = scmp.eq.s32.totalorder %s22, 0
      %p106 = por %p104, %p105
      %p107 = scmp.ne.s32.totalorder %s95, %s96
      %p108 = scmp.eq.s32.totalorder %s23, 1
      %p109 = por %p107, %p108
      %p111 = scmp.ne.s32.totalorder %s96, %s110
      %p112 = scmp.eq.s32.totalorder %s23, 0
      %p113 = por %p111, %p112
      %s115 = sadd.s32 %s114, 1
      %p118 = scmp.eq.s32.totalorder %s17, 1
      %p119 = scmp.ne.s32.totalorder %s114, %s116
      %p120 = scmp.eq.s32.totalorder %s17, 0
      %p121 = por %p119, %p120
      %p122 = scmp.ne.s32.totalorder %s114, %s116
      %p123 = scmp.eq.s32.totalorder %s22, 1
      %p124 = por %p122, %p123
      %p125 = scmp.ne.s32.totalorder %s116, %s117
      %p126 = scmp.eq.s32.totalorder %s22, 0
      %p127 = por %p125, %p126
      %p128 = scmp.ne.s32.totalorder %s116, %s117
      %p129 = scmp.eq.s32.totalorder %s23, 1
      %p130 = por %p128, %p129
      %p132 = scmp.ne.s32.totalorder %s117, %s131
      %p133 = scmp.eq.s32.totalorder %s23, 0
      %p134 = por %p132, %p133
      %s135 = ssub.s32 %s17, %s24
      %p136 = scmp.eq.s32.totalorder %s135, 0
      %s138 = sadd.s32 %s137, 1
      %s139 = scalar_select %p136, %s137, %s138
      %p142 = pneg %p136
      %p143 = scmp.eq.s32.totalorder %s17, 1
      %p144 = por %p142, %p143
      %p145 = scmp.ne.s32.totalorder %s137, %s140
      %p146 = scmp.eq.s32.totalorder %s17, 0
      %p147 = por %p145, %p146
      %p148 = scmp.ne.s32.totalorder %s137, %s140
      %p149 = scmp.eq.s32.totalorder %s22, 1
      %p150 = por %p148, %p149
      %p151 = scmp.ne.s32.totalorder %s140, %s141
      %p152 = scmp.eq.s32.totalorder %s22, 0
      %p153 = por %p151, %p152
      %p154 = scmp.ne.s32.totalorder %s140, %s141
      %p155 = scmp.eq.s32.totalorder %s23, 1
      %p156 = por %p154, %p155
      %p158 = scmp.ne.s32.totalorder %s141, %s157
      %p159 = scmp.eq.s32.totalorder %s23, 0
      %p160 = por %p158, %p159
      %p161 = scmp.le.s32.totalorder 1, %s17
      %p162 = scmp.lt.s32.totalorder %s17, 3
      %p163 = pnand %p161, %p162
      %p164 = pneg %p163
      // Predicated region
      $region9: #{tpu_custom_call.1} parent=5 // pred_check
        _
      $region10: #{tpu_custom_call.1} parent=5 // pred_check_branch
        %166 = sbr.rel (%p163) target = $region12
      $region11: #{tpu_custom_call.1} parent=5 // pred_region
        %s167 = ssub.s32 %s17, 1
        // Predicated region
        $region13: #{tpu_custom_call.1} parent=11 // pred_check
          %p168 = pneg %p64
        $region14: #{tpu_custom_call.1} parent=11 // pred_check_branch
          %170 = sbr.rel (%p168) target = $region16
        $region15: #{tpu_custom_call.1} parent=11 // pred_region
          _
        $region16: #{tpu_custom_call.1} parent=11 // pred_fallthru
          _
        // Predicated region
        $region17: #{tpu_custom_call.1} parent=11 // pred_check
          %p171 = pneg %p85
        $region18: #{tpu_custom_call.1} parent=11 // pred_check_branch
          %173 = sbr.rel (%p171) target = $region20
        $region19: #{tpu_custom_call.1} parent=11 // pred_region
          _
        $region20: #{tpu_custom_call.1} parent=11 // pred_fallthru
          _
        // Predicated region
        $region21: #{tpu_custom_call.1} parent=11 // pred_check
          %p174 = pneg %p106
        $region22: #{tpu_custom_call.1} parent=11 // pred_check_branch
          %176 = sbr.rel (%p174) target = $region24
        $region23: #{tpu_custom_call.1} parent=11 // pred_region
          _
        $region24: #{tpu_custom_call.1} parent=11 // pred_fallthru
          _
        // Predicated region
        $region25: #{tpu_custom_call.1} parent=11 // pred_check
          %p177 = pneg %p127
        $region26: #{tpu_custom_call.1} parent=11 // pred_check_branch
          %179 = sbr.rel (%p177) target = $region28
        $region27: #{tpu_custom_call.1} parent=11 // pred_region
          _
        $region28: #{tpu_custom_call.1} parent=11 // pred_fallthru
          _
      $region12: #{tpu_custom_call.1} parent=5 // pred_fallthru
        _
      %p180 = scmp.lt.s32.totalorder %s17, 2
      // Predicated region
      $region29: #{tpu_custom_call.1} parent=5 // pred_check
        %p181 = pneg %p180
      $region30: #{tpu_custom_call.1} parent=5 // pred_check_branch
        %183 = sbr.rel (%p181) target = $region32
      $region31: #{tpu_custom_call.1} parent=5 // pred_region
        // Predicated region
        $region33: #{tpu_custom_call.1} parent=31 // pred_check
          %p184 = pneg %p37
        $region34: #{tpu_custom_call.1} parent=31 // pred_check_branch
          %186 = sbr.rel (%p184) target = $region36
        $region35: #{tpu_custom_call.1} parent=31 // pred_region
          %s187 = sand.u32 %s27, 1
          %s188 = scalar_lea.sflag [#allocation3], %s187
          %s189 = sand.u32 %s27, 1
          %s190 = smul.addr %s189, 64
          %s191 = scalar_lea.vmem [#allocation2], %s190
          %193 = vsyncadd %s188, 0
          %s194 = smul.addr %s17, 8
          %s195 = smul.addr %s194, 8
          %s196 = scalar_lea.hbm %s0, %s195
          %s197 = sshll.u32 %s196, 4
          %s198 = int_to_ptr.hbm [resolvable:$true] %s197
          %s199 = sshll.u32 %s191, 4
          %s200 = int_to_ptr.vmem [resolvable:$true] %s199
          %205 = dma.hbm_to_vmem [thread:$0]  %s198, 1024, %s200, %s188, 256, 256, 16
        $region36: #{tpu_custom_call.1} parent=31 // pred_fallthru
          _
      $region32: #{tpu_custom_call.1} parent=5 // pred_fallthru
        _
      %p206 = scmp.le.s32.totalorder 1, %s17
      %p207 = scmp.lt.s32.totalorder %s17, 3
      %p208 = pnand %p206, %p207
      %p209 = pneg %p208
      // Predicated region
      $region37: #{tpu_custom_call.1} parent=5 // pred_check
        _
      $region38: #{tpu_custom_call.1} parent=5 // pred_check_branch
        %211 = sbr.rel (%p208) target = $region40
      $region39: #{tpu_custom_call.1} parent=5 // pred_region
        %s212 = ssub.s32 %s17, 1
        %s213 = sand.u32 %s30, 1
        %s214 = scalar_lea.sflag [#allocation3], %s213
        %s215 = sand.u32 %s30, 1
        %s216 = smul.addr %s215, 64
        %s217 = scalar_lea.vmem [#allocation2], %s216
        // Predicated region
        $region41: #{tpu_custom_call.1} parent=39 // pred_check
          %p218 = pneg %p43
        $region42: #{tpu_custom_call.1} parent=39 // pred_check_branch
          %220 = sbr.rel (%p218) target = $region44
        $region43: #{tpu_custom_call.1} parent=39 // pred_region
          %222 = dma.done %s214, 1024
        $region44: #{tpu_custom_call.1} parent=39 // pred_fallthru
          _
        %s223 = sand.u32 %s30, 1
        %s224 = scalar_lea.sflag [#allocation3], %s223
        %s225 = sand.u32 %s30, 1
        %s226 = smul.addr %s225, 64
        %s227 = scalar_lea.vmem [#allocation2], %s226
        %p228 = pneg %p43
        %p229 = pneg %p40
        %p230 = pneg %p64
        %p231 = pneg %p61
        %p232 = pneg %p85
        %p233 = pneg %p82
        %p234 = pneg %p106
        %p235 = pneg %p103
        %p236 = pneg %p127
        %p237 = pneg %p124
        %p238 = pneg %p153
        %p239 = pneg %p150
        %s240 = sand.u32 %s140, 1
        %s241 = scalar_lea.sflag [#allocation4], %s240
        %s242 = sand.u32 %s140, 1
        %s243 = smul.addr %s242, 64
        %s244 = scalar_lea.vmem [#allocation5], %s243
        %v245 = vld [vmem:[%s217] sm:$0xff]
        %v246 = vld [vmem:[%s217 + $0x8] sm:$0xff]
        %v247 = vld [vmem:[%s217 + $0x10] sm:$0xff]
        %v248 = vld [vmem:[%s217 + $0x18] sm:$0xff]
        %v249 = vld [vmem:[%s217 + $0x20] sm:$0xff]
        %v250 = vld [vmem:[%s217 + $0x28] sm:$0xff]
        %v251 = vld [vmem:[%s217 + $0x30] sm:$0xff]
        %v252 = vld [vmem:[%s217 + $0x38] sm:$0xff]
        %v253 = vadd.f32 %v245, %v246
        %254 = vadd.xlane.f32.xlu0 %v253
        %v255 = vpop.xlane.xlu0 %254
        %v256 = vadd.f32 %v247, %v248
        %257 = vadd.xlane.f32.xlu0 %v256
        %v258 = vpop.xlane.xlu0 %257
        %v259 = vadd.f32 %v249, %v250
        %260 = vadd.xlane.f32.xlu0 %v259
        %v261 = vpop.xlane.xlu0 %260
        %v262 = vadd.f32 %v251, %v252
        %263 = vadd.xlane.f32.xlu0 %v262
        %v264 = vpop.xlane.xlu0 %263
        %v265 = vmul.f32 %v255, 0.00390625
        %v266 = vmul.f32 %v258, 0.00390625
        %v267 = vmul.f32 %v261, 0.00390625
        %v268 = vmul.f32 %v264, 0.00390625
        %v269 = vmax.f32 %v245, %v246
        %270 = vmax.xlane.f32.xlu0 %v269
        %v271 = vpop.xlane.xlu0 %270
        %v272 = vmax.f32 %v247, %v248
        %273 = vmax.xlane.f32.xlu0 %v272
        %v274 = vpop.xlane.xlu0 %273
        %v275 = vmax.f32 %v249, %v250
        %276 = vmax.xlane.f32.xlu0 %v275
        %v277 = vpop.xlane.xlu0 %276
        %v278 = vmax.f32 %v251, %v252
        %279 = vmax.xlane.f32.xlu0 %v278
        %v280 = vpop.xlane.xlu0 %279
        %v281 = vsub.f32 %v245, %v271
        %v282 = vsub.f32 %v246, %v271
        %v283 = vsub.f32 %v247, %v274
        %v284 = vsub.f32 %v248, %v274
        %v285 = vsub.f32 %v249, %v277
        %v286 = vsub.f32 %v250, %v277
        %v287 = vsub.f32 %v251, %v280
        %v288 = vsub.f32 %v252, %v280
        %v289 = vmul.f32 %v281, 1.442695
        %v290 = vpow.pop %v289
        %v291 = vmul.f32 %v282, 1.442695
        %v292 = vpow.pop %v291
        %v293 = vmul.f32 %v283, 1.442695
        %v294 = vpow.pop %v293
        %v295 = vmul.f32 %v284, 1.442695
        %v296 = vpow.pop %v295
        %v297 = vmul.f32 %v285, 1.442695
        %v298 = vpow.pop %v297
        %v299 = vmul.f32 %v286, 1.442695
        %v300 = vpow.pop %v299
        %v301 = vmul.f32 %v287, 1.442695
        %v302 = vpow.pop %v301
        %v303 = vmul.f32 %v288, 1.442695
        %v304 = vpow.pop %v303
        %v305 = vadd.f32 %v290, %v292
        %306 = vadd.xlane.f32.xlu0 %v305
        %v307 = vpop.xlane.xlu0 %306
        %v308 = vadd.f32 %v294, %v296
        %309 = vadd.xlane.f32.xlu0 %v308
        %v310 = vpop.xlane.xlu0 %309
        %v311 = vadd.f32 %v298, %v300
        %312 = vadd.xlane.f32.xlu0 %v311
        %v313 = vpop.xlane.xlu0 %312
        %v314 = vadd.f32 %v302, %v304
        %315 = vadd.xlane.f32.xlu0 %v314
        %v316 = vpop.xlane.xlu0 %315
        %v317 = vlog2.pop %v307
        %v318 = vmul.f32 %v317, 0.6931472
        %v319 = vlog2.pop %v310
        %v320 = vmul.f32 %v319, 0.6931472
        %v321 = vlog2.pop %v313
        %v322 = vmul.f32 %v321, 0.6931472
        %v323 = vlog2.pop %v316
        %v324 = vmul.f32 %v323, 0.6931472
        %v325 = vadd.f32 %v271, %v318
        %v326 = vadd.f32 %v274, %v320
        %v327 = vadd.f32 %v277, %v322
        %v328 = vadd.f32 %v280, %v324
        %vm329 = vcmask 7168
        %v330 = vsel %vm329, %v265, %v271
        %v331 = vsel %vm329, %v266, %v274
        %v332 = vsel %vm329, %v267, %v277
        %v333 = vsel %vm329, %v268, %v280
        %vm334 = vcmask 15360
        %v335 = vsel %vm334, %v330, %v325
        %v336 = vsel %vm334, %v331, %v326
        %v337 = vsel %vm334, %v332, %v327
        %v338 = vsel %vm334, %v333, %v328
        %v339 = vld [vmem:[%s1] sm:$0x3]
        %v340 = vld [vmem:[%s2] sm:$0x3]
        %342 = vset.pattern.permute.xlu0 0
        %343 = vperm.xlu0 %342, %v340
        %v344 = vpop.permute.xlu0 %343
        %vm346 = vcmask 261120
        %v348 = vsel %vm346, %v339, 0
        %350 = vmatpush.msra.mxu0 0.0
        %351 = vmatpush.msra.mxu0 0.0
        %352 = vmatpush.msra.mxu0 0.0
        %353 = vmatpush.msra.mxu0 0.0
        %354 = vmatpush.msra.mxu0 0.0
        %355 = vmatpush.msra.mxu0 0.0
        %356 = vmatpush.msra.mxu0 0.0
        %357 = vmatpush.msra.mxu0 0.0
        %358 = vmatpush.msra.mxu0 0.0
        %359 = vmatpush.msra.mxu0 0.0
        %360 = vmatpush.msra.mxu0 0.0
        %361 = vmatpush.msra.mxu0 0.0
        %362 = vmatpush.msra.mxu0 %v338
        %363 = vmatpush.msra.mxu0 %v337
        %364 = vmatpush.msra.mxu0 %v336
        %365 = vmatpush.msra.mxu0 %v335
        %366 = vmatmul.f32.gmra.mxu0 %v348
        %v367 = vpop.f32.mrf.mxu0
        %v368 = vadd.f32 %v344, %v367
        %369 = vdwg.mxu0
        %v370 = vmax.f32 %v368, 0.0
        %v371 = vld [vmem:[%s3] sm:$0xff]
        %v372 = vld [vmem:[%s3 + $0x8] sm:$0xff]
        %v373 = vld [vmem:[%s3 + $0x10] sm:$0xff]
        %v374 = vld [vmem:[%s3 + $0x18] sm:$0xff]
        %v375 = vld [vmem:[%s4] sm:$0xff]
        %v376 = vld [vmem:[%s4 + $0x8] sm:$0xff]
        %v377 = vld [vmem:[%s4 + $0x10] sm:$0xff]
        %v378 = vld [vmem:[%s4 + $0x18] sm:$0xff]
        %380 = vset.pattern.permute.xlu0 0
        %381 = vperm.xlu0 %380, %v375
        %v382 = vpop.permute.xlu0 %381
        %385 = vset.pattern.permute.xlu0 0
        %386 = vperm.xlu0 %385, %v376
        %v387 = vpop.permute.xlu0 %386
        %390 = vset.pattern.permute.xlu0 0
        %391 = vperm.xlu0 %390, %v377
        %v392 = vpop.permute.xlu0 %391
        %395 = vset.pattern.permute.xlu0 0
        %396 = vperm.xlu0 %395, %v378
        %v397 = vpop.permute.xlu0 %396
        %v400 = vsel %vm334, %v371, 0
        %v403 = vsel %vm334, %v372, 0
        %v406 = vsel %vm334, %v373, 0
        %v409 = vsel %vm334, %v374, 0
        %vm411 = vcmask 1041408
        %v413 = vsel %vm411, %v370, 0
        %415 = vmatpush.msra.mxu0 0.0
        %416 = vmatpush.msra.mxu0 0.0
        %417 = vmatpush.msra.mxu0 0.0
        %418 = vmatpush.msra.mxu0 0.0
        %419 = vmatpush.msra.mxu0 0.0
        %420 = vmatpush.msra.mxu0 0.0
        %421 = vmatpush.msra.mxu0 0.0
        %422 = vmatpush.msra.mxu0 0.0
        %423 = vmatpush.msra.mxu0 0.0
        %424 = vmatpush.msra.mxu0 0.0
        %425 = vmatpush.msra.mxu0 0.0
        %426 = vmatpush.msra.mxu0 0.0
        %427 = vmatpush.msra.mxu0 0.0
        %428 = vmatpush.msra.mxu0 0.0
        %429 = vmatpush.msra.mxu0 0.0
        %430 = vmatpush.msra.mxu0 %v413
        %431 = vmatmul.f32.gmra.mxu0 %v400
        %v432 = vpop.f32.mrf.mxu0
        %v433 = vadd.f32 %v382, %v432
        %434 = vmatmul.f32.gmra.mxu0 %v403
        %v435 = vpop.f32.mrf.mxu0
        %v436 = vadd.f32 %v387, %v435
        %437 = vmatmul.f32.gmra.mxu0 %v406
        %v438 = vpop.f32.mrf.mxu0
        %v439 = vadd.f32 %v392, %v438
        %440 = vmatmul.f32.gmra.mxu0 %v409
        %v441 = vpop.f32.mrf.mxu0
        %v442 = vadd.f32 %v397, %v441
        %443 = vdwg.mxu0
        %vm444 = vcmask 23552
        %v445 = vsel %vm444, %v433, 0.0
        %446 = vadd.xlane.f32.xlu0 %v445
        %v447 = vpop.xlane.xlu0 %446
        %v448 = vsel %vm444, %v436, 0.0
        %449 = vadd.xlane.f32.xlu0 %v448
        %v450 = vpop.xlane.xlu0 %449
        %v451 = vsel %vm444, %v439, 0.0
        %452 = vadd.xlane.f32.xlu0 %v451
        %v453 = vpop.xlane.xlu0 %452
        %v454 = vsel %vm444, %v442, 0.0
        %455 = vadd.xlane.f32.xlu0 %v454
        %v456 = vpop.xlane.xlu0 %455
        %v457 = vsub.f32 0.0, %v447
        %v458 = vsub.f32 0.0, %v450
        %v459 = vsub.f32 0.0, %v453
        %v460 = vsub.f32 0.0, %v456
        %v461 = vmul.f32 %v457, 1.442695
        %v462 = vpow.pop %v461
        %v463 = vmul.f32 %v458, 1.442695
        %v464 = vpow.pop %v463
        %v465 = vmul.f32 %v459, 1.442695
        %v466 = vpow.pop %v465
        %v467 = vmul.f32 %v460, 1.442695
        %v468 = vpow.pop %v467
        %v469 = vadd.f32 %v462, 1.0
        %v470 = vadd.f32 %v464, 1.0
        %v471 = vadd.f32 %v466, 1.0
        %v472 = vadd.f32 %v468, 1.0
        %v473 = vrcp.pop %v469
        %v474 = vmul.f32 %v469, %v473
        %v475 = vsub.f32 1.0, %v474
        %v476 = vmul.f32 %v473, %v475
        %v477 = vadd.f32 %v473, %v476
        %vm478 = vweird.f32 %v469
        %vm479 = vweird.f32 %v473
        %vm480 = vmor %vm478, %vm479
        %v481 = vsel %vm480, %v473, %v477
        %v482 = vand.u32 2147483647, %v469
        %vm483 = vcmp.eq.f32.partialorder %v482, 8.507059e+37
        %v484 = vand.u32 %v469, 2147483648
        %v485 = vor.u32 1.1754944e-38, %v484
        %v486 = vsel %vm483, %v485, %v481
        %v487 = vmul.f32 1.0, %v486
        %v488 = vrcp.pop %v470
        %v489 = vmul.f32 %v470, %v488
        %v490 = vsub.f32 1.0, %v489
        %v491 = vmul.f32 %v488, %v490
        %v492 = vadd.f32 %v488, %v491
        %vm493 = vweird.f32 %v470
        %vm494 = vweird.f32 %v488
        %vm495 = vmor %vm493, %vm494
        %v496 = vsel %vm495, %v488, %v492
        %v497 = vand.u32 2147483647, %v470
        %vm498 = vcmp.eq.f32.partialorder %v497, 8.507059e+37
        %v499 = vand.u32 %v470, 2147483648
        %v500 = vor.u32 1.1754944e-38, %v499
        %v501 = vsel %vm498, %v500, %v496
        %v502 = vmul.f32 1.0, %v501
        %v503 = vrcp.pop %v471
        %v504 = vmul.f32 %v471, %v503
        %v505 = vsub.f32 1.0, %v504
        %v506 = vmul.f32 %v503, %v505
        %v507 = vadd.f32 %v503, %v506
        %vm508 = vweird.f32 %v471
        %vm509 = vweird.f32 %v503
        %vm510 = vmor %vm508, %vm509
        %v511 = vsel %vm510, %v503, %v507
        %v512 = vand.u32 2147483647, %v471
        %vm513 = vcmp.eq.f32.partialorder %v512, 8.507059e+37
        %v514 = vand.u32 %v471, 2147483648
        %v515 = vor.u32 1.1754944e-38, %v514
        %v516 = vsel %vm513, %v515, %v511
        %v517 = vmul.f32 1.0, %v516
        %v518 = vrcp.pop %v472
        %v519 = vmul.f32 %v472, %v518
        %v520 = vsub.f32 1.0, %v519
        %v521 = vmul.f32 %v518, %v520
        %v522 = vadd.f32 %v518, %v521
        %vm523 = vweird.f32 %v472
        %vm524 = vweird.f32 %v518
        %vm525 = vmor %vm523, %vm524
        %v526 = vsel %vm525, %v518, %v522
        %v527 = vand.u32 2147483647, %v472
        %vm528 = vcmp.eq.f32.partialorder %v527, 8.507059e+37
        %v529 = vand.u32 %v472, 2147483648
        %v530 = vor.u32 1.1754944e-38, %v529
        %v531 = vsel %vm528, %v530, %v526
        %v532 = vmul.f32 1.0, %v531
        %v533 = vmul.f32 %v245, %v487
        %v534 = vmul.f32 %v246, %v487
        %v535 = vmul.f32 %v247, %v502
        %v536 = vmul.f32 %v248, %v502
        %v537 = vmul.f32 %v249, %v517
        %v538 = vmul.f32 %v250, %v517
        %v539 = vmul.f32 %v251, %v532
        %v540 = vmul.f32 %v252, %v532
        %541 = vst [vmem:[%s244] sm:$0xff] %v533
        %542 = vst [vmem:[%s244 + $0x8] sm:$0xff] %v534
        %543 = vst [vmem:[%s244 + $0x10] sm:$0xff] %v535
        %544 = vst [vmem:[%s244 + $0x18] sm:$0xff] %v536
        %545 = vst [vmem:[%s244 + $0x20] sm:$0xff] %v537
        %546 = vst [vmem:[%s244 + $0x28] sm:$0xff] %v538
        %547 = vst [vmem:[%s244 + $0x30] sm:$0xff] %v539
        %548 = vst [vmem:[%s244 + $0x38] sm:$0xff] %v540
        %s549 = sand.u32 %s140, 1
        %s550 = scalar_lea.sflag [#allocation4], %s549
        %s551 = sand.u32 %s140, 1
        %s552 = smul.addr %s551, 64
        %s553 = scalar_lea.vmem [#allocation5], %s552
        // Predicated region
        $region45: #{tpu_custom_call.1} parent=39 // pred_check
          %p554 = pneg %p150
        $region46: #{tpu_custom_call.1} parent=39 // pred_check_branch
          %556 = sbr.rel (%p554) target = $region48
        $region47: #{tpu_custom_call.1} parent=39 // pred_region
          %558 = vsyncadd %s550, 0
          %s559 = smul.addr %s22, 8
          %s560 = smul.addr %s559, 8
          %s561 = scalar_lea.hbm %s5, %s560
          %s562 = sshll.u32 %s553, 4
          %s563 = int_to_ptr.vmem [resolvable:$true] %s562
          %s564 = sshll.u32 %s561, 4
          %s565 = int_to_ptr.hbm [resolvable:$true] %s564
          %570 = dma.vmem_to_hbm [thread:$0]  %s563, 1024, %s565, %s550, 256, 256, 16
        $region48: #{tpu_custom_call.1} parent=39 // pred_fallthru
          _
      $region40: #{tpu_custom_call.1} parent=5 // pred_fallthru
        _
      %p571 = scmp.le.s32.totalorder 2, %s17
      // Predicated region
      $region49: #{tpu_custom_call.1} parent=5 // pred_check
        %p572 = pneg %p571
      $region50: #{tpu_custom_call.1} parent=5 // pred_check_branch
        %574 = sbr.rel (%p572) target = $region52
      $region51: #{tpu_custom_call.1} parent=5 // pred_region
        %s575 = ssub.s32 %s17, 2
        // Predicated region
        $region53: #{tpu_custom_call.1} parent=51 // pred_check
          %p576 = pneg %p156
        $region54: #{tpu_custom_call.1} parent=51 // pred_check_branch
          %578 = sbr.rel (%p576) target = $region56
        $region55: #{tpu_custom_call.1} parent=51 // pred_region
          %s579 = sand.u32 %s141, 1
          %s580 = scalar_lea.sflag [#allocation4], %s579
          %s581 = sand.u32 %s141, 1
          %s582 = smul.addr %s581, 64
          %s583 = scalar_lea.vmem [#allocation5], %s582
          %585 = dma.done %s580, 1024
        $region56: #{tpu_custom_call.1} parent=51 // pred_fallthru
          _
      $region52: #{tpu_custom_call.1} parent=5 // pred_fallthru
        _
    $region6: #{tpu_custom_call.1} parent=1 // loop_footer
      %s21 = sadd.s32 1, %s17
    $region7: #{tpu_custom_call.1} parent=1 // loop_footer_branch
      %16 = sbr.rel target = $region3
    $region8: #{tpu_custom_call.1} parent=1 // loop_exit
      _
    %586 = vsyncpa [#allocation3], 1
    %s587 = scalar_lea.sflag [#allocation3], 1
    %588 = vsyncpa %s587, 1
    %589 = vsyncpa [#allocation4], 1
    %s590 = scalar_lea.sflag [#allocation4], 1
    %591 = vsyncpa %s590, 1

</llo_original>
